<compile_context>
chip_gen: v7x
topology: tpu7x:2x2x1
jax: 0.10.0
libtpu: 0.0.40
codegen_flags: <defaults>
</compile_context>

<pallas_src>
import functools

import jax
import jax.numpy as jnp
from jax.experimental import pallas as pl
from jax.experimental.pallas import tpu as pltpu


# ----------------------------- hardware-aware knobs -----------------------------

def _vmem_capacity_bytes():
    try:
        info = pltpu.get_tpu_info()
        cap = getattr(info, "vmem_capacity_bytes", None)
        if cap:
            return int(cap)
    except Exception:
        pass
    return 64 * 1024 * 1024          # conservative default (v7x per-TC VMEM)


def _vmem_limit_bytes():
    # 128 MiB parts (v5e/v6e): raise the scoped limit to 64 MiB; 64 MiB parts (v7x): 32 MiB.
    return (64 << 20) if _vmem_capacity_bytes() >= (100 << 20) else (32 << 20)


def _step_bytes_target():
    # Target (x + out) block bytes per grid step; bigger on high-VMEM / lower-BW parts.
    return (8 << 20) if _vmem_capacity_bytes() >= (100 << 20) else (4 << 20)


_MIN_GRID_STEPS = 8       # keep both v7x TensorCores busy and the DMA pipeline deep
_FUSED_ROWS_CAP = 16      # static unroll bound inside the fused pixel-shuffle kernel


def _pick_tile_hw(hw, per_pixel_bytes, batch):
    """Lane tile (pixels/step) for the unfused conv kernel: byte-targeted, >= _MIN_GRID_STEPS."""
    thw = (_step_bytes_target() // max(per_pixel_bytes, 1)) // 128 * 128
    thw = max(thw, 512)
    while thw > 512 and batch * pl.cdiv(hw, thw) < _MIN_GRID_STEPS:
        thw = max(512, (thw // 2) // 128 * 128)
    if thw >= hw:
        return hw                      # single spatial tile (block == full dim)
    return thw                         # multiple of 128, tail block is masked


def _pick_fused_rows(h, w, cin, n_chan, x_itemsize):
    """Input rows per grid step for the fused kernel (second-minor block dim: mult of 8 or H)."""
    bytes_per_row = w * (cin * x_itemsize + 2 * n_chan * 4)   # x row + packed-u32 output row
    rows = max(1, _step_bytes_target() // max(bytes_per_row, 1))
    rows = min(rows, _FUSED_ROWS_CAP)
    if rows >= h:
        return h
    return max(8, (rows // 8) * 8)


@functools.lru_cache(maxsize=None)
def _bitcast_low_half_first():
    """Does lax.bitcast_convert_type(u32 -> 16-bit) put the low-order half at index 0?"""
    probe = jax.lax.bitcast_convert_type(jnp.uint32(0x00020001), jnp.uint16)
    return int(jax.device_get(probe)[0]) == 1


# ----------------------------- unfused 1x1-conv kernel -----------------------------

def _conv1x1_kernel(x_ref, w_ref, b_ref, o_ref):
    # x_ref: (Cin, T)  w_ref: (Cout, Cin)  b_ref: (Cout, 1) f32  o_ref: (Cout, T)
    acc = jnp.dot(w_ref[...], x_ref[...], preferred_element_type=jnp.float32)
    o_ref[...] = (acc + b_ref[...]).astype(o_ref.dtype)


def conv1x1_pallas(x3d, weight, bias, *, out_dtype=None):
    """1x1 conv as W(Cout,Cin) @ X(Cin, HW) per batch row; spatial axis lane-dense.

    x3d: (B, Cin, H*W) (NCHW, spatial flattened — free reshape).  Returns (B, Cout, H*W)."""
    B, cin, hw = x3d.shape
    cout = weight.shape[0]
    out_dtype = jnp.dtype(x3d.dtype) if out_dtype is None else jnp.dtype(out_dtype)

    per_pixel = cin * jnp.dtype(x3d.dtype).itemsize + cout * out_dtype.itemsize
    thw = _pick_tile_hw(hw, per_pixel, B)
    grid = (B, pl.cdiv(hw, thw))

    bias2d = bias.reshape(cout, 1).astype(jnp.float32)
    w = weight.astype(x3d.dtype)

    cost = pl.CostEstimate(
        flops=2 * B * hw * cin * cout,
        transcendentals=0,
        bytes_accessed=(x3d.size * jnp.dtype(x3d.dtype).itemsize
                        + w.size * jnp.dtype(w.dtype).itemsize
                        + bias2d.size * 4
                        + B * hw * cout * out_dtype.itemsize))

    return pl.pallas_call(
        _conv1x1_kernel,
        out_shape=jax.ShapeDtypeStruct((B, cout, hw), out_dtype),
        grid_spec=pltpu.PrefetchScalarGridSpec(
            num_scalar_prefetch=0,
            grid=grid,
            in_specs=[
                pl.BlockSpec((None, cin, thw), lambda b, j: (b, 0, j)),   # x tile
                pl.BlockSpec((cout, cin), lambda b, j: (0, 0)),           # weight (resident)
                pl.BlockSpec((cout, 1), lambda b, j: (0, 0)),             # bias   (resident)
            ],
            out_specs=pl.BlockSpec((None, cout, thw), lambda b, j: (b, 0, j)),
        ),
        compiler_params=pltpu.CompilerParams(
            dimension_semantics=("parallel", "parallel"),
            vmem_limit_bytes=_vmem_limit_bytes(),
        ),
        cost_estimate=cost,
    )(x3d, w, bias2d)


# ----------------------------- fused conv + PixelShuffle(2), bf16 -----------------------------

def _bf16_bits_rne(x_f32):
    """f32 -> bf16 bit pattern (round-to-nearest-even) in the low 16 bits of a uint32."""
    u = pltpu.bitcast(x_f32, jnp.uint32)
    rnd = jnp.uint32(0x7FFF) + ((u >> 16) & jnp.uint32(1))
    return (u + rnd) >> 16


def _conv_shuffle_bf16_kernel(x_ref, w_ref, b_ref, o_ref, *, rows, n_chan):
    # x_ref: (Cin, rows, W)   w_ref: (4*n_chan, Cin)   b_ref: (4*n_chan, 1) f32
    # o_ref: (n_chan, rows, 2, W) uint32 — each word packs the (width j=0, j=1) bf16 pair.
    # Weight rows are pre-ordered so contiguous sublane slices of the matmul give the pack halves.
    w = w_ref[...]
    bias = b_ref[...]
    for hloc in range(rows):                               # static unroll, rows <= _FUSED_ROWS_CAP
        xr = x_ref[:, hloc, :]                             # (Cin, W)
        acc = jnp.dot(w, xr, preferred_element_type=jnp.float32) + bias    # (4n, W) f32
        lo0 = _bf16_bits_rne(acc[0 * n_chan:1 * n_chan])   # i=0, low half of the packed word
        hi0 = _bf16_bits_rne(acc[1 * n_chan:2 * n_chan])   # i=0, high half
        lo1 = _bf16_bits_rne(acc[2 * n_chan:3 * n_chan])   # i=1, low half
        hi1 = _bf16_bits_rne(acc[3 * n_chan:4 * n_chan])   # i=1, high half
        # NOTE: padded tail rows (H % rows != 0) compute garbage here; those block rows are never
        # DMA'd back to HBM, so this is benign.
        o_ref[:, hloc, 0, :] = lo0 | (hi0 << 16)
        o_ref[:, hloc, 1, :] = lo1 | (hi1 << 16)


def conv1x1_pixelshuffle2_bf16(x_nchw, weight, bias):
    """Fused 1x1 conv + PixelShuffle(2) with bf16 output.  x: (B, Cin, H, W) NCHW."""
    B, cin, H, W = x_nchw.shape
    cout = weight.shape[0]
    n_chan = cout // 4
    rows = _pick_fused_rows(H, W, cin, n_chan, jnp.dtype(x_nchw.dtype).itemsize)

    # Channel order inside the kernel: [pos0 | pos1 | pos2 | pos3] blocks of n_chan rows, where
    # pos = i*2 + (0 for the low 16-bit half, 1 for the high half).  The half <-> j mapping
    # follows the platform's bitcast sub-element ordering (probed once).
    low_first = _bitcast_low_half_first()
    order = []
    for pos in range(4):
        i = pos // 2
        j = (pos % 2) if low_first else 1 - (pos % 2)
        order.append(i * 2 + j)                            # source index within the r*r group
    w_r = weight.reshape(n_chan, 4, cin)
    b_r = bias.reshape(n_chan, 4)
    w4 = jnp.concatenate([w_r[:, o, :] for o in order], axis=0).astype(x_nchw.dtype)
    b4 = jnp.concatenate([b_r[:, o] for o in order], axis=0).reshape(4 * n_chan, 1)
    b4 = b4.astype(jnp.float32)

    kernel = functools.partial(_conv_shuffle_bf16_kernel, rows=rows, n_chan=n_chan)
    grid = (B, pl.cdiv(H, rows))

    cost = pl.CostEstimate(
        flops=2 * B * H * W * cin * cout,
        transcendentals=0,
        bytes_accessed=(x_nchw.size * jnp.dtype(x_nchw.dtype).itemsize
                        + w4.size * jnp.dtype(w4.dtype).itemsize
                        + b4.size * 4
                        + B * n_chan * H * 2 * W * 4))

    out_u32 = pl.pallas_call(
        kernel,
        out_shape=jax.ShapeDtypeStruct((B, n_chan, H, 2, W), jnp.uint32),
        grid_spec=pltpu.PrefetchScalarGridSpec(
            num_scalar_prefetch=0,
            grid=grid,
            in_specs=[
                pl.BlockSpec((None, cin, rows, W), lambda b, t: (b, 0, t, 0)),   # x rows tile
                pl.BlockSpec((4 * n_chan, cin), lambda b, t: (0, 0)),            # weight (resident)
                pl.BlockSpec((4 * n_chan, 1), lambda b, t: (0, 0)),              # bias   (resident)
            ],
            out_specs=pl.BlockSpec((None, n_chan, rows, 2, W),
                                   lambda b, t: (b, 0, t, 0, 0)),
        ),
        compiler_params=pltpu.CompilerParams(
            dimension_semantics=("parallel", "parallel"),
            vmem_limit_bytes=_vmem_limit_bytes(),
        ),
        cost_estimate=cost,
    )(x_nchw, w4, b4)

    # (B, n, H, 2, W) u32 --bitcast--> (B, n, H, 2, W, 2) bf16 --free reshape--> (B, n, 2H, 2W).
    out_bf16 = jax.lax.bitcast_convert_type(out_u32, jnp.bfloat16)
    return out_bf16.reshape(B, n_chan, 2 * H, 2 * W)


# ----------------------------- module wrapper -----------------------------

class UpSamplePallas:
    """Pallas port of bisenetv2.UpSample: 1x1 conv (xavier-normal weight, PyTorch-default bias)
    followed by PixelShuffle(factor).  Inputs/outputs are NCHW."""

    def __init__(self, n_chan, factor=2, *, key=None, compute_dtype=None):
        if key is None:
            key = jax.random.PRNGKey(0)
        self.n_chan = n_chan
        self.factor = factor
        self.compute_dtype = compute_dtype      # e.g. jnp.bfloat16 for the fused low-HBM path
        out_chan = n_chan * factor * factor

        kw, kb = jax.random.split(key)
        # nn.init.xavier_normal_(weight, gain=1.0): fan_in = n_chan, fan_out = out_chan.
        std = (2.0 / (n_chan + out_chan)) ** 0.5
        # PyTorch Conv2d weight layout (out_chan, in_chan, 1, 1) -> keep (Cout, Cin).
        self.weight = std * jax.random.normal(kw, (out_chan, n_chan), dtype=jnp.float32)
        # Conv2d default bias: uniform(-1/sqrt(fan_in), 1/sqrt(fan_in)).
        bound = 1.0 / (n_chan ** 0.5)
        self.bias = jax.random.uniform(kb, (out_chan,), minval=-bound, maxval=bound,
                                       dtype=jnp.float32)

    # --- pieces ---

    def _shuffle(self, feat3d, H, W):
        # XLA PixelShuffle fallback (f32 or factor != 2):
        # out[b, c, h*r+i, w*r+j] = feat[b, c*r*r + i*r + j, h, w]
        B = feat3d.shape[0]
        r = self.factor
        f = feat3d.reshape(B, self.n_chan, r, r, H, W)
        f = jnp.transpose(f, (0, 1, 4, 2, 5, 3))
        return f.reshape(B, self.n_chan, H * r, W * r)

    def _one(self, x_nchw):
        N, C, H, W = x_nchw.shape
        assert C == self.n_chan
        out_dtype = (jnp.dtype(self.compute_dtype) if self.compute_dtype is not None
                     else jnp.dtype(x_nchw.dtype))
        if self.factor == 2 and out_dtype == jnp.dtype(jnp.bfloat16):
            # Fused conv + pixel-shuffle: no separate shuffle pass over the feature map.
            return conv1x1_pixelshuffle2_bf16(x_nchw, self.weight, self.bias)
        feat = conv1x1_pallas(x_nchw.reshape(N, C, H * W), self.weight, self.bias,
                              out_dtype=out_dtype)
        return self._shuffle(feat, H, W)

    # --- forward ---

    def __call__(self, x, *other_x):
        # One pallas_call per input: no concatenate copy; weight/bias are a few KiB so the
        # "resident" saving of batching was not worth the extra HBM pass.
        return [self._one(t) for t in (x,) + tuple(other_x)]


# ----------------------------- pure-JAX reference -----------------------------

def _reference_upsample(x_nchw, weight_oc_ic, bias, n_chan, factor):
    feat = jnp.einsum("nchw,oc->nohw", x_nchw, weight_oc_ic,
                      precision=jax.lax.Precision.HIGHEST)
    feat = feat + bias[None, :, None, None]
    N, C, H, W = feat.shape
    r = factor
    f = feat.reshape(N, n_chan, r, r, H, W)
    f = jnp.transpose(f, (0, 1, 4, 2, 5, 3))
    return f.reshape(N, n_chan, H * r, W * r)


# ----------------------------- self-test -----------------------------

if __name__ == "__main__":
    key = jax.random.PRNGKey(0)
    k1, k2, k3, k4, k5, k6, k7 = jax.random.split(key, 7)

    # Test 1: f32, two same-shaped inputs -> unfused MXU path, one pallas_call per input.
    n_chan, factor = 4, 2
    N, H, W = 2, 16, 16
    mod = UpSamplePallas(n_chan, factor, key=k1)
    x = jax.random.normal(k2, (N, n_chan, H, W), dtype=jnp.float32)
    x2 = jax.random.normal(k3, (N, n_chan, H, W), dtype=jnp.float32)
    feats = [jax.block_until_ready(f) for f in mod(x, x2)]
    for inp, out in zip((x, x2), feats):
        ref = _reference_upsample(inp, mod.weight, mod.bias, n_chan, factor)
        assert out.shape == (N, n_chan, H * factor, W * factor), out.shape
        assert jnp.allclose(out, ref, atol=2e-2, rtol=2e-2), "f32 path mismatch (test 1)"

    # Test 2: wider channels + HW not a multiple of 128 -> cdiv tail masking on the lane tile.
    n_chan2 = 32
    N2, H2, W2 = 1, 24, 40
    mod2 = UpSamplePallas(n_chan2, 2, key=k4)
    x3 = jax.random.normal(k5, (N2, n_chan2, H2, W2), dtype=jnp.float32)
    (out3,) = mod2(x3)
    out3 = jax.block_until_ready(out3)
    ref3 = _reference_upsample(x3, mod2.weight, mod2.bias, n_chan2, 2)
    assert out3.shape == (N2, n_chan2, H2 * 2, W2 * 2), out3.shape
    assert jnp.allclose(out3, ref3, atol=2e-2, rtol=2e-2), "f32 path mismatch (test 2)"

    # Test 3: bf16 fused conv+shuffle path, W = 128 (lane-dense), single row tile (rows == H).
    n_chan3 = 8
    N3, H3, W3 = 1, 16, 128
    mod3 = UpSamplePallas(n_chan3, 2, key=k1, compute_dtype=jnp.bfloat16)
    x4 = jax.random.normal(k6, (N3, n_chan3, H3, W3), dtype=jnp.float32)
    (out4,) = mod3(x4)
    out4 = jax.block_until_ready(out4)
    ref4 = _reference_upsample(x4, mod3.weight, mod3.bias, n_chan3, 2)
    assert out4.dtype == jnp.bfloat16
    assert out4.shape == (N3, n_chan3, H3 * 2, W3 * 2), out4.shape
    assert jnp.allclose(out4.astype(jnp.float32), ref4, atol=6e-2, rtol=6e-2), \
        "bf16 fused path mismatch (test 3)"

    # Test 4: bf16 fused path with small non-128 W and a masked tail row-tile (H=40, rows=16).
    n_chan4 = 4
    N4, H4, W4 = 2, 40, 48
    mod4 = UpSamplePallas(n_chan4, 2, key=k4, compute_dtype=jnp.bfloat16)
    x5 = jax.random.normal(k7, (N4, n_chan4, H4, W4), dtype=jnp.float32)
    (out5,) = mod4(x5)
    out5 = jax.block_until_ready(out5)
    ref5 = _reference_upsample(x5, mod4.weight, mod4.bias, n_chan4, 2)
    assert out5.shape == (N4, n_chan4, H4 * 2, W4 * 2), out5.shape
    assert jnp.allclose(out5.astype(jnp.float32), ref5, atol=6e-2, rtol=6e-2), \
        "bf16 fused path mismatch (test 4)"

    # Test 5: factor != 2 -> general fallback (conv kernel + XLA shuffle).
    n_chan5, factor5 = 2, 3
    mod5 = UpSamplePallas(n_chan5, factor5, key=k5)
    x6 = jax.random.normal(k2, (1, n_chan5, 8, 8), dtype=jnp.float32)
    (out6,) = mod5(x6)
    out6 = jax.block_until_ready(out6)
    ref6 = _reference_upsample(x6, mod5.weight, mod5.bias, n_chan5, factor5)
    assert out6.shape == (1, n_chan5, 8 * factor5, 8 * factor5), out6.shape
    assert jnp.allclose(out6, ref6, atol=2e-2, rtol=2e-2), "factor=3 fallback mismatch"

    print("KERNEL_OK")
</pallas_src>

<mosaic_0001>
module attributes {stable_mosaic.version = 11 : i64} {
  func.func @_conv1x1_kernel(%arg0: i32, %arg1: i32, %arg2: memref<1x4x256xf32, #tpu.memory_space<vmem>>, %arg3: memref<16x4xf32, #tpu.memory_space<vmem>>, %arg4: memref<16x1xf32, #tpu.memory_space<vmem>>, %arg5: memref<1x16x256xf32, #tpu.memory_space<vmem>>) attributes {dimension_semantics = [#tpu.dimension_semantics<parallel>, #tpu.dimension_semantics<parallel>], iteration_bounds = array<i64: 2, 1>, scalar_prefetch = 0 : i64, scratch_operands = 0 : i64, tpu.core_type = #tpu.core_type<tc>, window_params = [{transform_indices = @transform_0, window_bounds = array<i64: 1, 4, 256>}, {pipeline_mode = #tpu.pipeline_mode<synchronous>, transform_indices = @transform_1, window_bounds = array<i64: 16, 4>}, {pipeline_mode = #tpu.pipeline_mode<synchronous>, transform_indices = @transform_2, window_bounds = array<i64: 16, 1>}, {transform_indices = @transform_3, window_bounds = array<i64: 1, 16, 256>}]} {
    %c0 = arith.constant 0 : index
    %c0_0 = arith.constant 0 : index
    %0 = vector.load %arg3[%c0, %c0_0] : memref<16x4xf32, #tpu.memory_space<vmem>>, vector<16x4xf32>
    %c0_1 = arith.constant 0 : index
    %c0_2 = arith.constant 0 : index
    %c0_3 = arith.constant 0 : index
    %1 = vector.load %arg2[%c0_1, %c0_2, %c0_3] : memref<1x4x256xf32, #tpu.memory_space<vmem>>, vector<1x4x256xf32>
    %2 = vector.shape_cast %1 : vector<1x4x256xf32> to vector<4x256xf32>
    %cst = arith.constant dense<0.000000e+00> : vector<16x256xf32>
    %3 = tpu.matmul %0, %2, %cst {dimension_numbers = #tpu.dot_dimension_numbers<[1], [0], [0], [1], [0, 0, 1, 1], [], []>} : vector<16x4xf32>, vector<4x256xf32>, vector<16x256xf32> -> vector<16x256xf32>
    %c0_4 = arith.constant 0 : index
    %c0_5 = arith.constant 0 : index
    %4 = vector.load %arg4[%c0_4, %c0_5] : memref<16x1xf32, #tpu.memory_space<vmem>>, vector<16x1xf32>
    %5 = vector.broadcast %4 : vector<16x1xf32> to vector<16x256xf32>
    %6 = arith.addf %3, %5 : vector<16x256xf32>
    %c0_6 = arith.constant 0 : index
    %c0_7 = arith.constant 0 : index
    %c0_8 = arith.constant 0 : index
    %7 = vector.load %arg5[%c0_6, %c0_7, %c0_8] : memref<1x16x256xf32, #tpu.memory_space<vmem>>, vector<1x16x256xf32>
    %8 = vector.shape_cast %7 : vector<1x16x256xf32> to vector<16x256xf32>
    %9 = vector.shape_cast %6 : vector<16x256xf32> to vector<1x16x256xf32>
    tpu.vector_store %arg5[%c0_6, %c0_7, %c0_8], %9 {strides = array<i32>} : memref<1x16x256xf32, #tpu.memory_space<vmem>>, vector<1x16x256xf32>,
    return
  }
  func.func @transform_0(%arg0: i32, %arg1: i32) -> (i32, i32, i32) {
    %c0_i32 = arith.constant 0 : i32
    %c0_i32_0 = arith.constant 0 : i32
    return %arg0, %c0_i32, %arg1 : i32, i32, i32
  }
  func.func @transform_1(%arg0: i32, %arg1: i32) -> (i32, i32) {
    %c0_i32 = arith.constant 0 : i32
    %c0_i32_0 = arith.constant 0 : i32
    %c0_i32_1 = arith.constant 0 : i32
    return %c0_i32, %c0_i32_0 : i32, i32
  }
  func.func @transform_2(%arg0: i32, %arg1: i32) -> (i32, i32) {
    %c0_i32 = arith.constant 0 : i32
    %c0_i32_0 = arith.constant 0 : i32
    %c0_i32_1 = arith.constant 0 : i32
    return %c0_i32, %c0_i32_0 : i32, i32
  }
  func.func @transform_3(%arg0: i32, %arg1: i32) -> (i32, i32, i32) {
    %c0_i32 = arith.constant 0 : i32
    %c0_i32_0 = arith.constant 0 : i32
    return %arg0, %c0_i32, %arg1 : i32, i32, i32
  }
}

</mosaic_0001>

<llo_original>
// kernel: tpu_custom_call.1
$region0: #{tpu_custom_call.1}
  #allocation0 [shape = 'u32[]', space=smem, size = 0x4, offset = 0x4, fixed_abs, tag = 'smem constant byte address 0x4 - core index']
  #allocation1 [shape = 'u32[144,128]{1,0:T(1,128)}', space=vmem, size = 0x12000, scoped, tag = 'internal scratch']
  %s0 = inlined_call_operand.vmem [shape: f32[2,4,256], index: 0, kind: input, shape index: {}]
  %s1 = inlined_call_operand.vmem [shape: f32[16,4], index: 1, kind: input, shape index: {}]
  %s2 = inlined_call_operand.vmem [shape: f32[16,1], index: 2, kind: input, shape index: {}]
  %s3 = inlined_call_operand.hbm [shape: f32[2,16,256], index: 3, kind: output, shape index: {}]
  %s4 = sld [smem:[#allocation0]]
  $region45: #{tpu_custom_call.1} parent=0
    _
  %s6 = ssub.s32 1, %s4
  %s7 = scalar_select 0, %s6, %s4
  $region1: #{tpu_custom_call.1} parent=0
    #allocation2 [shape = 'u8[32768]{0}', space=vmem, size = 0x8000, scoped, tag = 'output window, operand 0']
    #allocation3 [shape = 's32[2]{0}', space=sflag, size = 0x8, scoped, tag = 'scoped memory for tpu_custom_call.1']
    %8 = vsyncpa [#allocation3], 0
    %s9 = scalar_lea.sflag [#allocation3], 1
    %10 = vsyncpa %s9, 0
    loop: start=0, step=1, limit=4
    $region2: #{tpu_custom_call.1} parent=1 // loop_pre_header
      _
    $region3: #{tpu_custom_call.1} parent=1 // loop_header
      %s12 = sphi 0, %s16
      %p13 = scmp.ge.s32.totalorder %s12, 4
      %s19 = sphi 0, %s31
      %s20 = sphi 0, %s27
      %s21 = sphi 0, %s19
      %s22 = sphi 0, %s20
      %s23 = sphi 0, %s21
      %s24 = sphi 0, %s22
      %s36 = sphi 0, %s38
      %s39 = sphi 0, %s36
      %s40 = sphi 0, %s39
      %s56 = sphi 0, %s40
      %s60 = sphi 0, %s60
      %s62 = sphi 0, %s60
      %s63 = sphi 0, %s62
      %s77 = sphi 0, %s63
      %s81 = sphi 0, %s81
      %s83 = sphi 0, %s81
      %s84 = sphi 0, %s83
      %s98 = sphi 0, %s84
      %s106 = sphi 0, %s108
      %s109 = sphi 0, %s106
      %s110 = sphi 0, %s109
      %s126 = sphi 0, %s110
    $region4: #{tpu_custom_call.1} parent=1 // loop_header_branch
      %15 = sbr.rel (%p13) target = $region8
    $region5: #{tpu_custom_call.1} parent=1 // loop_body
      %s17 = ssub.s32 %s12, 1
      %s18 = ssub.s32 %s12, 2
      %s25 = sadd.s32 1, %s20
      %p26 = scmp.ge.s32.totalorder %s25, 1
      %s27 = scalar_select %p26, 0, %s25
      %s28 = sadd.s32 1, %s19
      %s29 = scalar_select %p26, %s28, %s19
      %p30 = scmp.ge.s32.totalorder %s29, 2
      %s31 = scalar_select %p30, 0, %s29
      %s32 = ssub.s32 %s19, %s31
      %s33 = ssub.s32 %s20, %s27
      %s34 = sor.u32 %s32, %s33
      %p35 = scmp.eq.s32.totalorder %s34, 0
      %s37 = sadd.s32 %s36, 1
      %s38 = scalar_select %p35, %s36, %s37
      %p41 = pneg %p35
      %p42 = scmp.eq.s32.totalorder %s12, 1
      %p43 = por %p41, %p42
      %p44 = scmp.ne.s32.totalorder %s36, %s39
      %p45 = scmp.eq.s32.totalorder %s12, 0
      %p46 = por %p44, %p45
      %p47 = scmp.ne.s32.totalorder %s36, %s39
      %p48 = scmp.eq.s32.totalorder %s17, 1
      %p49 = por %p47, %p48
      %p50 = scmp.ne.s32.totalorder %s39, %s40
      %p51 = scmp.eq.s32.totalorder %s17, 0
      %p52 = por %p50, %p51
      %p53 = scmp.ne.s32.totalorder %s39, %s40
      %p54 = scmp.eq.s32.totalorder %s18, 1
      %p55 = por %p53, %p54
      %p57 = scmp.ne.s32.totalorder %s40, %s56
      %p58 = scmp.eq.s32.totalorder %s18, 0
      %p59 = por %p57, %p58
      %s61 = sadd.s32 %s60, 1
      %p64 = scmp.eq.s32.totalorder %s12, 1
      %p65 = scmp.ne.s32.totalorder %s60, %s62
      %p66 = scmp.eq.s32.totalorder %s12, 0
      %p67 = por %p65, %p66
      %p68 = scmp.ne.s32.totalorder %s60, %s62
      %p69 = scmp.eq.s32.totalorder %s17, 1
      %p70 = por %p68, %p69
      %p71 = scmp.ne.s32.totalorder %s62, %s63
      %p72 = scmp.eq.s32.totalorder %s17, 0
      %p73 = por %p71, %p72
      %p74 = scmp.ne.s32.totalorder %s62, %s63
      %p75 = scmp.eq.s32.totalorder %s18, 1
      %p76 = por %p74, %p75
      %p78 = scmp.ne.s32.totalorder %s63, %s77
      %p79 = scmp.eq.s32.totalorder %s18, 0
      %p80 = por %p78, %p79
      %s82 = sadd.s32 %s81, 1
      %p85 = scmp.eq.s32.totalorder %s12, 1
      %p86 = scmp.ne.s32.totalorder %s81, %s83
      %p87 = scmp.eq.s32.totalorder %s12, 0
      %p88 = por %p86, %p87
      %p89 = scmp.ne.s32.totalorder %s81, %s83
      %p90 = scmp.eq.s32.totalorder %s17, 1
      %p91 = por %p89, %p90
      %p92 = scmp.ne.s32.totalorder %s83, %s84
      %p93 = scmp.eq.s32.totalorder %s17, 0
      %p94 = por %p92, %p93
      %p95 = scmp.ne.s32.totalorder %s83, %s84
      %p96 = scmp.eq.s32.totalorder %s18, 1
      %p97 = por %p95, %p96
      %p99 = scmp.ne.s32.totalorder %s84, %s98
      %p100 = scmp.eq.s32.totalorder %s18, 0
      %p101 = por %p99, %p100
      %s102 = ssub.s32 %s19, %s31
      %s103 = ssub.s32 %s20, %s27
      %s104 = sor.u32 %s102, %s103
      %p105 = scmp.eq.s32.totalorder %s104, 0
      %s107 = sadd.s32 %s106, 1
      %s108 = scalar_select %p105, %s106, %s107
      %p111 = pneg %p105
      %p112 = scmp.eq.s32.totalorder %s12, 1
      %p113 = por %p111, %p112
      %p114 = scmp.ne.s32.totalorder %s106, %s109
      %p115 = scmp.eq.s32.totalorder %s12, 0
      %p116 = por %p114, %p115
      %p117 = scmp.ne.s32.totalorder %s106, %s109
      %p118 = scmp.eq.s32.totalorder %s17, 1
      %p119 = por %p117, %p118
      %p120 = scmp.ne.s32.totalorder %s109, %s110
      %p121 = scmp.eq.s32.totalorder %s17, 0
      %p122 = por %p120, %p121
      %p123 = scmp.ne.s32.totalorder %s109, %s110
      %p124 = scmp.eq.s32.totalorder %s18, 1
      %p125 = por %p123, %p124
      %p127 = scmp.ne.s32.totalorder %s110, %s126
      %p128 = scmp.eq.s32.totalorder %s18, 0
      %p129 = por %p127, %p128
      %p130 = scmp.le.s32.totalorder 1, %s12
      %p131 = scmp.lt.s32.totalorder %s12, 3
      %p132 = pnand %p130, %p131
      %p133 = pneg %p132
      // Predicated region
      $region9: #{tpu_custom_call.1} parent=5 // pred_check
        _
      $region10: #{tpu_custom_call.1} parent=5 // pred_check_branch
        %135 = sbr.rel (%p132) target = $region12
      $region11: #{tpu_custom_call.1} parent=5 // pred_region
        %s136 = ssub.s32 %s12, 1
        // Predicated region
        $region13: #{tpu_custom_call.1} parent=11 // pred_check
          %p137 = pneg %p73
        $region14: #{tpu_custom_call.1} parent=11 // pred_check_branch
          %139 = sbr.rel (%p137) target = $region16
        $region15: #{tpu_custom_call.1} parent=11 // pred_region
          _
        $region16: #{tpu_custom_call.1} parent=11 // pred_fallthru
          _
        // Predicated region
        $region17: #{tpu_custom_call.1} parent=11 // pred_check
          %p140 = pneg %p94
        $region18: #{tpu_custom_call.1} parent=11 // pred_check_branch
          %142 = sbr.rel (%p140) target = $region20
        $region19: #{tpu_custom_call.1} parent=11 // pred_region
          _
        $region20: #{tpu_custom_call.1} parent=11 // pred_fallthru
          _
      $region12: #{tpu_custom_call.1} parent=5 // pred_fallthru
        _
      %p143 = scmp.lt.s32.totalorder %s12, 2
      // Predicated region
      $region21: #{tpu_custom_call.1} parent=5 // pred_check
        %p144 = pneg %p143
      $region22: #{tpu_custom_call.1} parent=5 // pred_check_branch
        %146 = sbr.rel (%p144) target = $region24
      $region23: #{tpu_custom_call.1} parent=5 // pred_region
        // Predicated region
        $region25: #{tpu_custom_call.1} parent=23 // pred_check
          %p147 = pneg %p46
        $region26: #{tpu_custom_call.1} parent=23 // pred_check_branch
          %149 = sbr.rel (%p147) target = $region28
        $region27: #{tpu_custom_call.1} parent=23 // pred_region
          %s150 = smul.u32 2, %s20
          %p151 = scmp.lt.s32.totalorder %s19, 1
          %s152 = scalar_select %p151, %s19, 1
          %p153 = scmp.lt.s32.totalorder %s150, 1
          %s154 = scalar_select %p153, %s150, 1
          %s155 = smul.addr %s152, 2
          %s156 = sadd.s32 %s154, %s155
          %s157 = smul.addr %s156, 4
          %s158 = scalar_lea.vmem %s0, %s157
          %s159 = smul.u32 2, %s20
        $region28: #{tpu_custom_call.1} parent=23 // pred_fallthru
          _
      $region24: #{tpu_custom_call.1} parent=5 // pred_fallthru
        _
      %p160 = scmp.le.s32.totalorder 1, %s12
      %p161 = scmp.lt.s32.totalorder %s12, 3
      %p162 = pnand %p160, %p161
      %p163 = pneg %p162
      // Predicated region
      $region29: #{tpu_custom_call.1} parent=5 // pred_check
        _
      $region30: #{tpu_custom_call.1} parent=5 // pred_check_branch
        %165 = sbr.rel (%p162) target = $region32
      $region31: #{tpu_custom_call.1} parent=5 // pred_region
        %s166 = ssub.s32 %s12, 1
        %s167 = smul.u32 2, %s22
        %p168 = scmp.lt.s32.totalorder %s21, 1
        %s169 = scalar_select %p168, %s21, 1
        %p170 = scmp.lt.s32.totalorder %s167, 1
        %s171 = scalar_select %p170, %s167, 1
        %s172 = smul.addr %s169, 2
        %s173 = sadd.s32 %s171, %s172
        %s174 = smul.addr %s173, 4
        %s175 = scalar_lea.vmem %s0, %s174
        %p176 = pneg %p52
        %p177 = pneg %p49
        %p178 = pneg %p73
        %p179 = pneg %p70
        %p180 = pneg %p94
        %p181 = pneg %p91
        %p182 = pneg %p122
        %p183 = pneg %p119
        %s184 = sand.u32 %s109, 1
        %s185 = scalar_lea.sflag [#allocation3], %s184
        %s186 = sand.u32 %s109, 1
        %s187 = smul.addr %s186, 32
        %s188 = scalar_lea.vmem [#allocation2], %s187
        %s189 = smul.u32 2, %s22
        %p190 = scmp.lt.s32.totalorder %s21, 1
        %s191 = scalar_select %p190, %s21, 1
        %p192 = scmp.lt.s32.totalorder %s189, 1
        %s193 = scalar_select %p192, %s189, 1
        %s194 = smul.addr %s191, 2
        %s195 = sadd.s32 %s193, %s194
        %s196 = smul.addr %s195, 4
        %s197 = scalar_lea.vmem %s0, %s196
        %s198 = smul.u32 2, %s22
        %s199 = smul.u32 2, %s22
        %v200 = vld [vmem:[%s1] sm:$0xff]
        %v201 = vld [vmem:[%s1 + $0x8] sm:$0xff]
        %v202 = vld [vmem:[%s197] sm:$0xff]
        %v203 = vld [vmem:[%s2] sm:$0xff]
        %v204 = vld [vmem:[%s2 + $0x8] sm:$0xff]
        %206 = vset.pattern.permute.xlu0 0
        %207 = vperm.xlu0 %206, %v203
        %v208 = vpop.permute.xlu0 %207
        %211 = vset.pattern.permute.xlu0 0
        %212 = vperm.xlu0 %211, %v204
        %v213 = vpop.permute.xlu0 %212
        %v216 = vcombine.high %v202, %v202
        %vm217 = vcmask 31744
        %v219 = vsel %vm217, %v200, 0
        %v222 = vsel %vm217, %v201, 0
        %vm224 = vcmask 1043456
        %v225 = vsel %vm224, %v202, 0
        %v227 = vsel %vm224, %v216, 0
        %229 = vmatprep.subr.mxu0 %v227
        %230 = vmatpush1.msra.mxu0 %v225
        %231 = vmatprep.subr.mxu0 0.0
        %232 = vmatpush1.msra.mxu0 0.0
        %233 = vmatprep.subr.mxu0 0.0
        %234 = vmatpush1.msra.mxu0 0.0
        %235 = vmatprep.subr.mxu0 0.0
        %236 = vmatpush1.msra.mxu0 0.0
        %237 = vmatprep.subr.mxu0 0.0
        %238 = vmatpush1.msra.mxu0 0.0
        %239 = vmatprep.subr.mxu0 0.0
        %240 = vmatpush1.msra.mxu0 0.0
        %241 = vmatprep.subr.mxu0 0.0
        %242 = vmatpush1.msra.mxu0 0.0
        %243 = vmatprep.subr.mxu0 0.0
        %244 = vmatpush1.msra.mxu0 0.0
        %245 = vmatprep.subr.mxu0 0.0
        %246 = vmatpush1.msra.mxu0 0.0
        %247 = vmatprep.subr.mxu0 0.0
        %248 = vmatpush1.msra.mxu0 0.0
        %249 = vmatprep.subr.mxu0 0.0
        %250 = vmatpush1.msra.mxu0 0.0
        %251 = vmatprep.subr.mxu0 0.0
        %252 = vmatpush1.msra.mxu0 0.0
        %253 = vmatprep.subr.mxu0 0.0
        %254 = vmatpush1.msra.mxu0 0.0
        %255 = vmatprep.subr.mxu0 0.0
        %256 = vmatpush1.msra.mxu0 0.0
        %257 = vmatprep.subr.mxu0 0.0
        %258 = vmatpush1.msra.mxu0 0.0
        %259 = vmatprep.subr.mxu0 0.0
        %260 = vmatpush1.msra.mxu0 0.0
        %261 = vmatprep.subr.mxu0 0.0
        %262 = vmatpush1.msra.mxu0 0.0
        %263 = vmatprep.subr.mxu0 0.0
        %264 = vmatpush1.msra.mxu0 0.0
        %265 = vmatprep.subr.mxu0 0.0
        %266 = vmatpush1.msra.mxu0 0.0
        %267 = vmatprep.subr.mxu0 0.0
        %268 = vmatpush1.msra.mxu0 0.0
        %269 = vmatprep.subr.mxu0 0.0
        %270 = vmatpush1.msra.mxu0 0.0
        %271 = vmatprep.subr.mxu0 0.0
        %272 = vmatpush1.msra.mxu0 0.0
        %273 = vmatprep.subr.mxu0 0.0
        %274 = vmatpush1.msra.mxu0 0.0
        %275 = vmatprep.subr.mxu0 0.0
        %276 = vmatpush1.msra.mxu0 0.0
        %277 = vmatprep.subr.mxu0 0.0
        %278 = vmatpush1.msra.mxu0 0.0
        %279 = vmatprep.subr.mxu0 0.0
        %280 = vmatpush1.msra.mxu0 0.0
        %281 = vmatprep.subr.mxu0 0.0
        %282 = vmatpush1.msra.mxu0 0.0
        %283 = vmatprep.subr.mxu0 0.0
        %284 = vmatpush1.msra.mxu0 0.0
        %285 = vmatprep.subr.mxu0 0.0
        %286 = vmatpush1.msra.mxu0 0.0
        %287 = vmatprep.subr.mxu0 0.0
        %288 = vmatpush1.msra.mxu0 0.0
        %289 = vmatprep.subr.mxu0 0.0
        %290 = vmatpush1.msra.mxu0 0.0
        %291 = vmatprep.subr.mxu0 0.0
        %292 = vmatpush1.msra.mxu0 0.0
        %293 = vmatprep.mubr.f32.mxu0 0.0
        %294 = vmatmul.mubr.f32.gmra.mrb[0].mxu0 %v219
        %v295 = vpop.f32.mrb[0].mxu0
        %v296 = vadd.f32 %v208, %v295
        %v297 = vpop.f32.mrb[0].mxu0
        %v298 = vadd.f32 %v208, %v297
        %299 = vmatprep.mubr.f32.mxu0 0.0
        %300 = vmatmul.mubr.f32.gmra.mrb[0].mxu0 %v222
        %v301 = vpop.f32.mrb[0].mxu0
        %v302 = vadd.f32 %v213, %v301
        %v303 = vpop.f32.mrb[0].mxu0
        %v304 = vadd.f32 %v213, %v303
        %305 = vdwg.mxu0
        %306 = vst [vmem:[%s188] sm:$0xff] %v296
        %307 = vst [vmem:[%s188 + $0x8] sm:$0xff] %v298
        %308 = vst [vmem:[%s188 + $0x10] sm:$0xff] %v302
        %309 = vst [vmem:[%s188 + $0x18] sm:$0xff] %v304
        %s310 = sand.u32 %s109, 1
        %s311 = scalar_lea.sflag [#allocation3], %s310
        %s312 = sand.u32 %s109, 1
        %s313 = smul.addr %s312, 32
        %s314 = scalar_lea.vmem [#allocation2], %s313
        // Predicated region
        $region33: #{tpu_custom_call.1} parent=31 // pred_check
          %p315 = pneg %p119
        $region34: #{tpu_custom_call.1} parent=31 // pred_check_branch
          %317 = sbr.rel (%p315) target = $region36
        $region35: #{tpu_custom_call.1} parent=31 // pred_region
          %s318 = smul.u32 2, %s22
          %s320 = ssub.s32 512, 512
          %321 = vsyncadd %s311, %s320
          %s322 = smul.addr %s21, 4
          %s323 = sadd.s32 %s318, %s322
          %s324 = smul.addr %s323, 128
          %s325 = scalar_lea.hbm %s3, %s324
          %s326 = sshll.u32 %s314, 4
          %s327 = int_to_ptr.vmem [resolvable:$true] %s326
          %332 = dma.vmem_to_hbm [thread:$0]  %s327, 512, %s325, %s311, 256, 256, 16
        $region36: #{tpu_custom_call.1} parent=31 // pred_fallthru
          _
      $region32: #{tpu_custom_call.1} parent=5 // pred_fallthru
        _
      %p333 = scmp.le.s32.totalorder 2, %s12
      // Predicated region
      $region37: #{tpu_custom_call.1} parent=5 // pred_check
        %p334 = pneg %p333
      $region38: #{tpu_custom_call.1} parent=5 // pred_check_branch
        %336 = sbr.rel (%p334) target = $region40
      $region39: #{tpu_custom_call.1} parent=5 // pred_region
        %s337 = ssub.s32 %s12, 2
        // Predicated region
        $region41: #{tpu_custom_call.1} parent=39 // pred_check
          %p338 = pneg %p125
        $region42: #{tpu_custom_call.1} parent=39 // pred_check_branch
          %340 = sbr.rel (%p338) target = $region44
        $region43: #{tpu_custom_call.1} parent=39 // pred_region
          %s341 = sand.u32 %s110, 1
          %s342 = scalar_lea.sflag [#allocation3], %s341
          %s343 = sand.u32 %s110, 1
          %s344 = smul.addr %s343, 32
          %s345 = scalar_lea.vmem [#allocation2], %s344
          %346 = dma.done %s342, 512
        $region44: #{tpu_custom_call.1} parent=39 // pred_fallthru
          _
      $region40: #{tpu_custom_call.1} parent=5 // pred_fallthru
        _
    $region6: #{tpu_custom_call.1} parent=1 // loop_footer
      %s16 = sadd.s32 1, %s12
    $region7: #{tpu_custom_call.1} parent=1 // loop_footer_branch
      %11 = sbr.rel target = $region3
    $region8: #{tpu_custom_call.1} parent=1 // loop_exit
      _
    %347 = vsyncpa [#allocation3], 1
    %s348 = scalar_lea.sflag [#allocation3], 1
    %349 = vsyncpa %s348, 1

</llo_original>
